<compile_context>
chip_gen: v7x
topology: tpu7x:2x2x1
jax: 0.10.0
libtpu: 0.0.40
codegen_flags: <defaults>
</compile_context>

<pallas_src>
from functools import partial

import jax
import jax.numpy as jnp
from jax.experimental import pallas as pl
from jax.experimental.pallas import tpu as pltpu

# Hyper-parameters implied by args.* in the reference module.
BETA_0 = 0.1                    # args.diffusion_beta_min
BETA_1 = 20.0                   # args.diffusion_beta_max
NUM_DIFFUSION_TIMESTEPS = 1000  # args.num_diffusion_timesteps
EMB_DIM = 32                    # args.emb_dim
EPSILON = 1e-6


def _denoising_kernel(pos_ref, noise_ref, t_ref,
                      w1_ref, b1_ref, w2_ref, b2_ref,
                      loss_ref, *, inv_n):
    pos = pos_ref[...]        # [N, 3] float32
    noise = noise_ref[...]    # [N, 3] float32
    t = t_ref[...]            # [N, 1] float32 (per-node diffusion time)

    # ---- surrogate score network (stands in for get_score / FrameNet) -------
    # Layer 1 (4 -> EMB_DIM) as VPU broadcast-FMAs: avoids a K=4 MXU matmul and
    # the wrapper-side concat([pos, t]). Elementwise math stays f32 (v5e VPU).
    w1 = w1_ref[...]          # [4, EMB_DIM]
    b1 = b1_ref[...]          # [1, EMB_DIM]
    h = (pos[:, 0:1] * w1[0:1, :]
         + pos[:, 1:2] * w1[1:2, :]
         + pos[:, 2:3] * w1[2:3, :]
         + t * w1[3:4, :]
         + b1)                                                  # [N, EMB_DIM]
    h = jnp.maximum(h, 0.0)

    # Layer 2 (EMB_DIM -> 3) on the MXU: bf16 operands, f32 accumulation.
    delta = jnp.dot(h.astype(jnp.bfloat16),
                    w2_ref[...].astype(jnp.bfloat16),
                    preferred_element_type=jnp.float32) + b2_ref[...]  # [N, 3]

    # ---- loss = mean_n sum_xyz (noise - delta)^2 (single fused reduction) ---
    d = noise - delta
    loss_ref[0] = jnp.sum(d * d) * inv_n

    # NOTE: the reference also computes pos_perturbed = mean + std * noise via
    # marginal_prob(), but it is unused by the returned loss -> elided here
    # (removes the masked [N,3] store + HBM writeback and the exp EUP work).


def init_params(key):
    k1, k2 = jax.random.split(key)
    w1 = jax.random.normal(k1, (4, EMB_DIM), jnp.float32) / jnp.sqrt(4.0)
    b1 = jnp.zeros((1, EMB_DIM), jnp.float32)
    w2 = jax.random.normal(k2, (EMB_DIM, 3), jnp.float32) / jnp.sqrt(float(EMB_DIM))
    b2 = jnp.zeros((1, 3), jnp.float32)
    return {"w1": w1, "b1": b1, "w2": w2, "b2": b2}


@partial(jax.jit, static_argnames=("num_graphs",))
def denoising_ld_forward(ligand_positions, node2graph, params, key, *, num_graphs):
    """Reproduces DenoisingLD.forward (surrogate score model), fully jitted.

    ligand_positions: [N, 3] float32
    node2graph:       [N]    int32 graph id per node
    num_graphs:       static Python int (replaces the host-sync .max().item())
    Returns scalar loss (float32).
    """
    n = ligand_positions.shape[0]
    k_noise, k_t = jax.random.split(key)

    # torch.randn_like(ligand_positions)
    pos_noise = jax.random.normal(k_noise, ligand_positions.shape, jnp.float32)

    # Antithetic timestep sampling, then normalize to (EPSILON, 1).
    ts = jax.random.randint(k_t, (num_graphs // 2 + 1,), 0, NUM_DIFFUSION_TIMESTEPS)
    ts = jnp.concatenate([ts, NUM_DIFFUSION_TIMESTEPS - ts - 1], axis=0)[:num_graphs]
    ts = ts.astype(jnp.float32) / NUM_DIFFUSION_TIMESTEPS * (1.0 - EPSILON) + EPSILON

    # t_pos = time_step.index_select(0, node2graph)  (cheap gather, fused by XLA)
    t_col = ts[node2graph][:, None].astype(jnp.float32)          # [N, 1]

    kernel = partial(_denoising_kernel, inv_n=1.0 / n)

    loss = pl.pallas_call(
        kernel,
        out_shape=jax.ShapeDtypeStruct((1,), jnp.float32),        # scalar loss
        in_specs=[pl.BlockSpec(memory_space=pltpu.MemorySpace.VMEM)] * 7,
        out_specs=pl.BlockSpec(memory_space=pltpu.MemorySpace.SMEM),
    )(ligand_positions, pos_noise, t_col,
      params["w1"], params["b1"], params["w2"], params["b2"])

    return loss[0]


if __name__ == "__main__":
    key = jax.random.PRNGKey(0)
    k_pos, k_params, k_fwd = jax.random.split(key, 3)

    # Small deterministic inputs: 16 ligand atoms split across 2 graphs.
    N = 16
    NUM_GRAPHS = 2
    ligand_positions = jax.random.normal(k_pos, (N, 3), jnp.float32)
    node2graph = jnp.repeat(jnp.arange(NUM_GRAPHS, dtype=jnp.int32), N // NUM_GRAPHS)

    params = init_params(k_params)

    loss = denoising_ld_forward(ligand_positions, node2graph, params, k_fwd,
                                num_graphs=NUM_GRAPHS)
    loss = jax.block_until_ready(loss)
    assert loss.ndim == 0
    assert jnp.isfinite(loss)
    print("KERNEL_OK")
</pallas_src>

<mosaic_0001>
module attributes {stable_mosaic.version = 11 : i64} {
  func.func @_denoising_kernel(%arg0: memref<16x3xf32, #tpu.memory_space<vmem>>, %arg1: memref<16x3xf32, #tpu.memory_space<vmem>>, %arg2: memref<16x1xf32, #tpu.memory_space<vmem>>, %arg3: memref<4x32xf32, #tpu.memory_space<vmem>>, %arg4: memref<1x32xf32, #tpu.memory_space<vmem>>, %arg5: memref<32x3xf32, #tpu.memory_space<vmem>>, %arg6: memref<1x3xf32, #tpu.memory_space<vmem>>, %arg7: memref<1xf32, #tpu.memory_space<smem>>) attributes {dimension_semantics = [], scalar_prefetch = 0 : i64, scratch_operands = 0 : i64, tpu.core_type = #tpu.core_type<tc>} {
    %c0 = arith.constant 0 : index
    %c0_0 = arith.constant 0 : index
    %0 = vector.load %arg0[%c0, %c0_0] : memref<16x3xf32, #tpu.memory_space<vmem>>, vector<16x3xf32>
    %c0_1 = arith.constant 0 : index
    %c0_2 = arith.constant 0 : index
    %1 = vector.load %arg1[%c0_1, %c0_2] : memref<16x3xf32, #tpu.memory_space<vmem>>, vector<16x3xf32>
    %c0_3 = arith.constant 0 : index
    %c0_4 = arith.constant 0 : index
    %2 = vector.load %arg2[%c0_3, %c0_4] : memref<16x1xf32, #tpu.memory_space<vmem>>, vector<16x1xf32>
    %c0_5 = arith.constant 0 : index
    %c0_6 = arith.constant 0 : index
    %3 = vector.load %arg3[%c0_5, %c0_6] : memref<4x32xf32, #tpu.memory_space<vmem>>, vector<4x32xf32>
    %c0_7 = arith.constant 0 : index
    %c0_8 = arith.constant 0 : index
    %4 = vector.load %arg4[%c0_7, %c0_8] : memref<1x32xf32, #tpu.memory_space<vmem>>, vector<1x32xf32>
    %5 = vector.extract_strided_slice %0 {offsets = [0, 0], sizes = [16, 1], strides = [1, 1]} : vector<16x3xf32> to vector<16x1xf32>
    %6 = vector.extract_strided_slice %3 {offsets = [0, 0], sizes = [1, 32], strides = [1, 1]} : vector<4x32xf32> to vector<1x32xf32>
    %7 = vector.broadcast %5 : vector<16x1xf32> to vector<16x32xf32>
    %8 = vector.broadcast %6 : vector<1x32xf32> to vector<16x32xf32>
    %9 = arith.mulf %7, %8 : vector<16x32xf32>
    %10 = vector.extract_strided_slice %0 {offsets = [0, 1], sizes = [16, 1], strides = [1, 1]} : vector<16x3xf32> to vector<16x1xf32>
    %11 = vector.extract_strided_slice %3 {offsets = [1, 0], sizes = [1, 32], strides = [1, 1]} : vector<4x32xf32> to vector<1x32xf32>
    %12 = vector.broadcast %10 : vector<16x1xf32> to vector<16x32xf32>
    %13 = vector.broadcast %11 : vector<1x32xf32> to vector<16x32xf32>
    %14 = arith.mulf %12, %13 : vector<16x32xf32>
    %15 = arith.addf %9, %14 : vector<16x32xf32>
    %16 = vector.extract_strided_slice %0 {offsets = [0, 2], sizes = [16, 1], strides = [1, 1]} : vector<16x3xf32> to vector<16x1xf32>
    %17 = vector.extract_strided_slice %3 {offsets = [2, 0], sizes = [1, 32], strides = [1, 1]} : vector<4x32xf32> to vector<1x32xf32>
    %18 = vector.broadcast %16 : vector<16x1xf32> to vector<16x32xf32>
    %19 = vector.broadcast %17 : vector<1x32xf32> to vector<16x32xf32>
    %20 = arith.mulf %18, %19 : vector<16x32xf32>
    %21 = arith.addf %15, %20 : vector<16x32xf32>
    %22 = vector.extract_strided_slice %3 {offsets = [3, 0], sizes = [1, 32], strides = [1, 1]} : vector<4x32xf32> to vector<1x32xf32>
    %23 = vector.broadcast %2 : vector<16x1xf32> to vector<16x32xf32>
    %24 = vector.broadcast %22 : vector<1x32xf32> to vector<16x32xf32>
    %25 = arith.mulf %23, %24 : vector<16x32xf32>
    %26 = arith.addf %21, %25 : vector<16x32xf32>
    %27 = vector.broadcast %4 : vector<1x32xf32> to vector<16x32xf32>
    %28 = arith.addf %26, %27 : vector<16x32xf32>
    %cst = arith.constant 0.000000e+00 : f32
    %29 = vector.broadcast %cst : f32 to vector<16x32xf32>
    %30 = arith.maximumf %28, %29 : vector<16x32xf32>
    %31 = arith.truncf %30 : vector<16x32xf32> to vector<16x32xbf16>
    %c0_9 = arith.constant 0 : index
    %c0_10 = arith.constant 0 : index
    %32 = vector.load %arg5[%c0_9, %c0_10] : memref<32x3xf32, #tpu.memory_space<vmem>>, vector<32x3xf32>
    %33 = arith.truncf %32 : vector<32x3xf32> to vector<32x3xbf16>
    %cst_11 = arith.constant dense<0.000000e+00> : vector<16x3xf32>
    %34 = tpu.matmul %31, %33, %cst_11 {dimension_numbers = #tpu.dot_dimension_numbers<[1], [0], [0], [1], [0, 0, 1, 1], [], []>} : vector<16x32xbf16>, vector<32x3xbf16>, vector<16x3xf32> -> vector<16x3xf32>
    %c0_12 = arith.constant 0 : index
    %c0_13 = arith.constant 0 : index
    %35 = vector.load %arg6[%c0_12, %c0_13] : memref<1x3xf32, #tpu.memory_space<vmem>>, vector<1x3xf32>
    %36 = vector.broadcast %35 : vector<1x3xf32> to vector<16x3xf32>
    %37 = arith.addf %34, %36 : vector<16x3xf32>
    %38 = arith.subf %1, %37 : vector<16x3xf32>
    %39 = arith.mulf %38, %38 : vector<16x3xf32>
    %40 = vector.shape_cast %39 : vector<16x3xf32> to vector<1x16x3xf32>
    %cst_14 = arith.constant dense<0.000000e+00> : vector<1xf32>
    %41 = vector.multi_reduction <add>, %40, %cst_14 [1, 2] : vector<1x16x3xf32> to vector<1xf32>
    %42 = vector.shape_cast %41 : vector<1xf32> to vector<1x1x1xf32>
    %43 = vector.extract %42[0, 0, 0] : f32 from vector<1x1x1xf32>
    %cst_15 = arith.constant 6.250000e-02 : f32
    %44 = arith.mulf %43, %cst_15 : f32
    %c0_16 = arith.constant 0 : index
    %45 = memref.load %arg7[%c0_16] : memref<1xf32, #tpu.memory_space<smem>>
    memref.store %44, %arg7[%c0_16] : memref<1xf32, #tpu.memory_space<smem>>
    return
  }
}

</mosaic_0001>

<llo_original>
// kernel: denoising_ld_forward.21
$region0: #{denoising_ld_forward.21}
  #allocation0 [shape = 'u32[]', space=smem, size = 0x4, offset = 0x4, fixed_abs, tag = 'smem constant byte address 0x4 - core index']
  #allocation1 [shape = 'u32[144,128]{1,0:T(1,128)}', space=vmem, size = 0x12000, scoped, tag = 'internal scratch']
  %s0 = inlined_call_operand.vmem [shape: f32[16,3], index: 0, kind: input, shape index: {}]
  %s1 = inlined_call_operand.vmem [shape: f32[16,3], index: 1, kind: input, shape index: {}]
  %s2 = inlined_call_operand.vmem [shape: f32[16,1], index: 2, kind: input, shape index: {}]
  %s3 = inlined_call_operand.vmem [shape: f32[4,32], index: 3, kind: input, shape index: {}]
  %s4 = inlined_call_operand.vmem [shape: f32[1,32], index: 4, kind: input, shape index: {}]
  %s5 = inlined_call_operand.vmem [shape: f32[32,3], index: 5, kind: input, shape index: {}]
  %s6 = inlined_call_operand.vmem [shape: f32[1,3], index: 6, kind: input, shape index: {}]
  %s7 = inlined_call_operand.hbm [shape: f32[1], index: 7, kind: output, shape index: {}]
  %s8 = sld [smem:[#allocation0]]
  $region38: #{denoising_ld_forward.21} parent=0
    _
  %s10 = ssub.s32 1, %s8
  %s11 = scalar_select 0, %s10, %s8
  $region1: #{denoising_ld_forward.21} parent=0
    #allocation2 [shape = 'u8[512]{0}', space=smem, size = 0x200, scoped, tag = 'output window, operand 0, single buffered']
    #allocation3 [shape = 's32[1]{0}', space=sflag, size = 0x4, scoped, tag = 'scoped memory for denoising_ld_forward.21']
    %12 = vsyncpa [#allocation3], 0
    // Predicated region
    $region2: #{denoising_ld_forward.21} parent=1 // pred_check
      _
    $region3: #{denoising_ld_forward.21} parent=1 // pred_check_branch
      %14 = sbr.rel (0) target = $region5
    $region4: #{denoising_ld_forward.21} parent=1 // pred_region
      _
    $region5: #{denoising_ld_forward.21} parent=1 // pred_fallthru
      _
    // Predicated region
    $region6: #{denoising_ld_forward.21} parent=1 // pred_check
      _
    $region7: #{denoising_ld_forward.21} parent=1 // pred_check_branch
      %16 = sbr.rel (0) target = $region9
    $region8: #{denoising_ld_forward.21} parent=1 // pred_region
      _
    $region9: #{denoising_ld_forward.21} parent=1 // pred_fallthru
      _
    // Predicated region
    $region10: #{denoising_ld_forward.21} parent=1 // pred_check
      _
    $region11: #{denoising_ld_forward.21} parent=1 // pred_check_branch
      %18 = sbr.rel (0) target = $region13
    $region12: #{denoising_ld_forward.21} parent=1 // pred_region
      _
    $region13: #{denoising_ld_forward.21} parent=1 // pred_fallthru
      _
    // Predicated region
    $region14: #{denoising_ld_forward.21} parent=1 // pred_check
      _
    $region15: #{denoising_ld_forward.21} parent=1 // pred_check_branch
      %20 = sbr.rel (0) target = $region17
    $region16: #{denoising_ld_forward.21} parent=1 // pred_region
      _
    $region17: #{denoising_ld_forward.21} parent=1 // pred_fallthru
      _
    // Predicated region
    $region18: #{denoising_ld_forward.21} parent=1 // pred_check
      _
    $region19: #{denoising_ld_forward.21} parent=1 // pred_check_branch
      %22 = sbr.rel (0) target = $region21
    $region20: #{denoising_ld_forward.21} parent=1 // pred_region
      _
    $region21: #{denoising_ld_forward.21} parent=1 // pred_fallthru
      _
    // Predicated region
    $region22: #{denoising_ld_forward.21} parent=1 // pred_check
      _
    $region23: #{denoising_ld_forward.21} parent=1 // pred_check_branch
      %24 = sbr.rel (0) target = $region25
    $region24: #{denoising_ld_forward.21} parent=1 // pred_region
      _
    $region25: #{denoising_ld_forward.21} parent=1 // pred_fallthru
      _
    // Predicated region
    $region26: #{denoising_ld_forward.21} parent=1 // pred_check
      _
    $region27: #{denoising_ld_forward.21} parent=1 // pred_check_branch
      %26 = sbr.rel (0) target = $region29
    $region28: #{denoising_ld_forward.21} parent=1 // pred_region
      _
    $region29: #{denoising_ld_forward.21} parent=1 // pred_fallthru
      _
    %v28 = vld [vmem:[%s0] sm:$0xff]
    %v29 = vld [vmem:[%s0 + $0x8] sm:$0xff]
    %v30 = vld [vmem:[%s1] sm:$0xff]
    %v31 = vld [vmem:[%s1 + $0x8] sm:$0xff]
    %v32 = vld [vmem:[%s2] sm:$0xff]
    %v33 = vld [vmem:[%s2 + $0x8] sm:$0xff]
    %v34 = vld [vmem:[%s3] sm:$0xf]
    %v35 = vld [vmem:[%s4] sm:$0x1]
    %37 = vset.pattern.permute.xlu0 0
    %38 = vperm.xlu0 %37, %v28
    %v39 = vpop.permute.xlu0 %38
    %42 = vset.pattern.permute.xlu0 0
    %43 = vperm.xlu0 %42, %v29
    %v44 = vpop.permute.xlu0 %43
    %v46 = vlaneseq
    %v47 = vshrl.u32 %v46, 7
    %v48 = vsub.s32 0, %v47
    %v49 = vrot.slane %v34, %v48
    %v50 = vmul.f32 %v39, %v49
    %v51 = vmul.f32 %v44, %v49
    %52 = vset.pattern.permute.xlu0 1
    %53 = vperm.xlu0 %52, %v28
    %v54 = vpop.permute.xlu0 %53
    %56 = vset.pattern.permute.xlu0 1
    %57 = vperm.xlu0 %56, %v29
    %v58 = vpop.permute.xlu0 %57
    %v60 = vlaneseq
    %v61 = vshrl.u32 %v60, 7
    %v62 = vsub.s32 1, %v61
    %v63 = vrot.slane %v34, %v62
    %v64 = vmul.f32 %v54, %v63
    %v65 = vmul.f32 %v58, %v63
    %v66 = vadd.f32 %v50, %v64
    %v67 = vadd.f32 %v51, %v65
    %68 = vset.pattern.permute.xlu0 2
    %69 = vperm.xlu0 %68, %v28
    %v70 = vpop.permute.xlu0 %69
    %72 = vset.pattern.permute.xlu0 2
    %73 = vperm.xlu0 %72, %v29
    %v74 = vpop.permute.xlu0 %73
    %v76 = vlaneseq
    %v77 = vshrl.u32 %v76, 7
    %v78 = vsub.s32 2, %v77
    %v79 = vrot.slane %v34, %v78
    %v80 = vmul.f32 %v70, %v79
    %v81 = vmul.f32 %v74, %v79
    %v82 = vadd.f32 %v66, %v80
    %v83 = vadd.f32 %v67, %v81
    %85 = vset.pattern.permute.xlu0 0
    %86 = vperm.xlu0 %85, %v32
    %v87 = vpop.permute.xlu0 %86
    %90 = vset.pattern.permute.xlu0 0
    %91 = vperm.xlu0 %90, %v33
    %v92 = vpop.permute.xlu0 %91
    %v94 = vlaneseq
    %v95 = vshrl.u32 %v94, 7
    %v96 = vsub.s32 3, %v95
    %v97 = vrot.slane %v34, %v96
    %v98 = vmul.f32 %v87, %v97
    %v99 = vmul.f32 %v92, %v97
    %v100 = vadd.f32 %v82, %v98
    %v101 = vadd.f32 %v83, %v99
    %v103 = vlaneseq
    %v104 = vshrl.u32 %v103, 7
    %v105 = vsub.s32 0, %v104
    %v106 = vrot.slane %v35, %v105
    %v108 = vadd.f32 %v100, %v106
    %v109 = vadd.f32 %v101, %v106
    %v110 = vmax.f32 %v108, 0.0
    %v111 = vmax.f32 %v109, 0.0
    %v112 = vpack.c.bf16 %v111, %v110
    %v113 = vld [vmem:[%s5] sm:$0xff]
    %v114 = vld [vmem:[%s5 + $0x8] sm:$0xff]
    %v115 = vld [vmem:[%s5 + $0x10] sm:$0xff]
    %v116 = vld [vmem:[%s5 + $0x18] sm:$0xff]
    %v117 = vpack.c.bf16 %v114, %v113
    %v118 = vpack.c.bf16 %v116, %v115
    %v119 = vld [vmem:[%s6] sm:$0x1]
    %v121 = vlaneseq
    %v122 = vshrl.u32 %v121, 7
    %v123 = vsub.s32 0, %v122
    %v124 = vrot.slane %v119, %v123
    %vm126 = vcmask 261120
    %v128 = vsel %vm126, %v112, 0
    %130 = vmatprep.subr.bf16.mxu0 0
    %131 = vmatpush1.bf16.msra.mxu0 %v117
    %132 = vmatprep.subr.bf16.mxu0 0
    %133 = vmatpush1.bf16.msra.mxu0 %v118
    %134 = vmatprep.subr.bf16.mxu0 0
    %135 = vmatpush1.bf16.msra.mxu0 0
    %136 = vmatprep.subr.bf16.mxu0 0
    %137 = vmatpush1.bf16.msra.mxu0 0
    %138 = vmatprep.subr.bf16.mxu0 0
    %139 = vmatpush1.bf16.msra.mxu0 0
    %140 = vmatprep.subr.bf16.mxu0 0
    %141 = vmatpush1.bf16.msra.mxu0 0
    %142 = vmatprep.subr.bf16.mxu0 0
    %143 = vmatpush1.bf16.msra.mxu0 0
    %144 = vmatprep.subr.bf16.mxu0 0
    %145 = vmatpush1.bf16.msra.mxu0 0
    %146 = vmatprep.subr.bf16.mxu0 0
    %147 = vmatpush1.bf16.msra.mxu0 0
    %148 = vmatprep.subr.bf16.mxu0 0
    %149 = vmatpush1.bf16.msra.mxu0 0
    %150 = vmatprep.subr.bf16.mxu0 0
    %151 = vmatpush1.bf16.msra.mxu0 0
    %152 = vmatprep.subr.bf16.mxu0 0
    %153 = vmatpush1.bf16.msra.mxu0 0
    %154 = vmatprep.subr.bf16.mxu0 0
    %155 = vmatpush1.bf16.msra.mxu0 0
    %156 = vmatprep.subr.bf16.mxu0 0
    %157 = vmatpush1.bf16.msra.mxu0 0
    %158 = vmatprep.subr.bf16.mxu0 0
    %159 = vmatpush1.bf16.msra.mxu0 0
    %160 = vmatprep.subr.bf16.mxu0 0
    %161 = vmatpush1.bf16.msra.mxu0 0
    %162 = vmatprep.mubr.bf16.mxu0 0
    %163 = vmatmul.mubr.bf16.gmra.mrb[0].mxu0 %v128
    %v164 = vpop.f32.mrb[0].mxu0
    %v165 = vadd.f32 %v124, %v164
    %v166 = vpop.f32.mrb[0].mxu0
    %v167 = vpop.f32.mrb[0].mxu0
    %v168 = vadd.f32 %v124, %v167
    %v169 = vpop.f32.mrb[0].mxu0
    %170 = vdwg.mxu0
    %v171 = vsub.f32 %v30, %v165
    %v172 = vsub.f32 %v31, %v168
    %v173 = vmul.f32 %v171, %v171
    %v174 = vmul.f32 %v172, %v172
    %vm175 = vcmask 23552
    %v176 = vsel %vm175, %v173, 0.0
    %v177 = vsel %vm175, %v174, 0.0
    %v178 = vadd.f32 %v176, %v177
    %179 = vadd.xlane.f32.xlu0 %v178
    %v180 = vpop.xlane.xlu0 %179
    %v181 = vrot.slane %v180, 4
    %v182 = vadd.f32 %v180, %v181
    %v183 = vrot.slane %v182, 2
    %v184 = vadd.f32 %v182, %v183
    %v185 = vrot.slane %v184, 1
    %v186 = vadd.f32 %v184, %v185
    %s187 = vtos %v186
    %s188 = smul.f32 %s187, 0.0625
    %s189 = scalar_lea.smem [#allocation2], 0
    %190 = sst [smem:[%s189]] %s188
    // Predicated region
    $region30: #{denoising_ld_forward.21} parent=1 // pred_check
      _
    $region31: #{denoising_ld_forward.21} parent=1 // pred_check_branch
      %192 = sbr.rel (0) target = $region33
    $region32: #{denoising_ld_forward.21} parent=1 // pred_region
      %s194 = ssub.s32 16, 16
      %195 = vsyncadd [#allocation3], %s194
      %198 = dma.smem_to_hbm [#allocation2], 16, %s7, [#allocation3]
    $region33: #{denoising_ld_forward.21} parent=1 // pred_fallthru
      _
    // Predicated region
    $region34: #{denoising_ld_forward.21} parent=1 // pred_check
      _
    $region35: #{denoising_ld_forward.21} parent=1 // pred_check_branch
      %200 = sbr.rel (0) target = $region37
    $region36: #{denoising_ld_forward.21} parent=1 // pred_region
      %201 = dma.done [#allocation3], 16
    $region37: #{denoising_ld_forward.21} parent=1 // pred_fallthru
      _
    %202 = sfence
    %203 = vsyncpa [#allocation3], 1

</llo_original>
